<compile_context>
chip_gen: v7x
topology: tpu7x:2x2x1
jax: 0.10.0
libtpu: 0.0.40
codegen_flags: <defaults>
</compile_context>

<pallas_src>
import functools

import jax
import jax.numpy as jnp
from jax.experimental import pallas as pl
from jax.experimental.pallas import tpu as pltpu

_LANE = 128       # lane width (last dim)
_SUBLANE = 8      # sublane width (second-to-last dim)
_TILE_M_MAX = 512  # big M tiles amortize per-grid-step overhead (~85% HBM roofline)


def _round_up(x, m):
    return (x + m - 1) // m * m


def _pick_tile_m(batch):
    """M tile: multiple of 8, capped at 512, and small enough that there are
    >= 2 grid steps whenever batch > 8 (so the v7x megacore gets both TCs)."""
    half = _round_up(pl.cdiv(batch, 2), _SUBLANE)
    return max(_SUBLANE, min(_TILE_M_MAX, half))


def _mlp_kernel(*refs, n_layers):
    """Fused MLP: refs = (x, w1, b1, w2, b2, ..., wn, bn, out).

    x:  [TILE_M, K0]        (row-major, features on lanes; any dtype)
    wl: [K_{l-1}, N_l_pad]  (pre-transposed, bf16, output dims padded to 128)
    bl: [1, N_l_pad]        (f32, broadcast over rows)
    out:[TILE_M, N_n_pad]   (f32)

    Intermediates stay in vregs; casts to the weight dtype (bf16) happen
    in-kernel, matmuls accumulate in f32, ReLU fused on hidden layers.
    """
    x_ref = refs[0]
    o_ref = refs[-1]
    h = x_ref[...]
    for l in range(n_layers):
        w_ref = refs[1 + 2 * l]
        b_ref = refs[2 + 2 * l]
        h = jnp.dot(h.astype(w_ref.dtype), w_ref[...],
                    preferred_element_type=jnp.float32)
        h = h + b_ref[...]
        if l < n_layers - 1:
            h = jnp.maximum(h, 0.0)
    o_ref[...] = h.astype(o_ref.dtype)


def _fused_forward(x, fused_flat, *, n_layers, out_pad, output_size):
    """Flatten -> single fused Pallas MLP -> slice real logits. Jitted."""
    B = x.shape[0]
    x2 = x.reshape(B, -1)              # Flatten: metadata-only, no HBM copy
    K = x2.shape[1]

    tile_m = _pick_tile_m(B)
    grid = (pl.cdiv(B, tile_m),)       # partial last M block handled by Pallas

    # x tile spans the FULL feature extent (no column padding, no pad copy).
    in_specs = [pl.BlockSpec((tile_m, K), lambda i: (i, 0))]
    for arr in fused_flat:
        # Whole (small) weight / bias resident; constant index_map -> fetched
        # once, never re-DMA'd across grid steps.
        in_specs.append(pl.BlockSpec(arr.shape, lambda i: (0, 0)))

    # Scoped-VMEM budget from actual buffer needs (double-buffered) + headroom.
    x_bytes = tile_m * K * x2.dtype.itemsize
    o_bytes = tile_m * out_pad * 4
    w_bytes = sum(int(a.size) * a.dtype.itemsize for a in fused_flat)
    need = 2 * (x_bytes + o_bytes + w_bytes) + (2 << 20)
    vmem_limit = int(min(max(need, 16 << 20), 64 << 20))

    kernel = functools.partial(_mlp_kernel, n_layers=n_layers)
    out = pl.pallas_call(
        kernel,
        out_shape=jax.ShapeDtypeStruct((B, out_pad), jnp.float32),
        grid=grid,
        in_specs=in_specs,
        out_specs=pl.BlockSpec((tile_m, out_pad), lambda i: (i, 0)),
        compiler_params=pltpu.CompilerParams(
            dimension_semantics=("parallel",),
            vmem_limit_bytes=vmem_limit),
    )(x2, *fused_flat)

    # Drop the lane padding columns (real logits only).
    return out[:, :output_size]


class ChoiceClassifierPallas:
    """JAX/Pallas equivalent of TI/models/classifier.ChoiceClassifier
    (default flags: bias=True, dropout=False, group_norm=0, batch_norm=False)."""

    def __init__(self, input_size, hidden_sizes, output_size, key,
                 param_dtype=jnp.bfloat16):
        # ---- raw f32 parameters (PyTorch nn.Linear layout: W [out, in], b [out]) ----
        self.raw_params = []
        sizes = list(hidden_sizes) + [output_size]
        in_size = input_size
        for out_size in sizes:
            key, wk, bk = jax.random.split(key, 3)
            bound = 1.0 / (in_size ** 0.5)   # nn.Linear uniform(-1/sqrt(in), 1/sqrt(in))
            w = jax.random.uniform(wk, (out_size, in_size), jnp.float32,
                                   minval=-bound, maxval=bound)
            b = jax.random.uniform(bk, (out_size,), jnp.float32,
                                   minval=-bound, maxval=bound)
            self.raw_params.append((w, b))
            in_size = out_size

        # ---- fused kernel parameters, built ONCE at init ----
        # Pre-transposed [K, N_pad]; output/hidden dims zero-padded to 128
        # lanes (lane-dense MXU tiles and stores); weights cast to bf16
        # (accumulation stays f32 in-kernel); biases f32 [1, N_pad].
        # First layer keeps UNPADDED K rows so x needs no column padding.
        fused = []
        k_pad = input_size
        for (w, b) in self.raw_params:
            n, k = w.shape
            n_pad = _round_up(n, _LANE)
            w_t = jnp.zeros((k_pad, n_pad), param_dtype)
            w_t = w_t.at[:k, :n].set(w.T.astype(param_dtype))
            b_p = jnp.zeros((1, n_pad), jnp.float32).at[0, :n].set(b)
            fused.append(w_t)
            fused.append(b_p)
            k_pad = n_pad
        self.fused_flat = tuple(fused)
        self.out_pad = k_pad
        self.output_size = output_size

        # Note: tile_m depends on the (static) batch size, so new batch sizes
        # trigger a retrace/recompile — acceptable for inference-style use.
        self._jit_forward = jax.jit(functools.partial(
            _fused_forward,
            n_layers=len(sizes),
            out_pad=self.out_pad,
            output_size=output_size,
        ))

    def __call__(self, x, length=None):
        # Raw logits; Softmax is defined in the PyTorch __init__ but never
        # applied in forward. `length` is accepted but ignored, as in PyTorch.
        return self._jit_forward(x, self.fused_flat)


if __name__ == "__main__":
    key = jax.random.PRNGKey(0)
    key, xk, pk = jax.random.split(key, 3)

    # Small shapes consistent with the module: NCHW input flattened to 4*16*16 = 1024.
    B, C, H, W = 2, 4, 16, 16
    input_size = C * H * W
    hidden_sizes = (32, 32)
    output_size = 8

    x = jax.random.normal(xk, (B, C, H, W), jnp.float32)

    model = ChoiceClassifierPallas(input_size, hidden_sizes, output_size, pk)
    out = jax.block_until_ready(model(x))
    assert out.shape == (B, output_size)

    # 1) Exact-math reference: same bf16-weight / f32-accumulate math in plain
    #    JAX, using the actual fused (padded, bf16) kernel parameters.
    n_layers = len(model.raw_params)
    ref = x.reshape(B, -1)
    for l in range(n_layers):
        w_p = model.fused_flat[2 * l]
        b_p = model.fused_flat[2 * l + 1]
        ref = jnp.dot(ref.astype(w_p.dtype), w_p,
                      preferred_element_type=jnp.float32) + b_p
        if l < n_layers - 1:
            ref = jnp.maximum(ref, 0.0)
    ref = ref[:, :output_size]
    assert jnp.allclose(out, ref, atol=1e-3, rtol=1e-3)

    # 2) Semantic sanity vs. the original full-f32 math (loose tol: bf16 weights).
    ref32 = x.reshape(B, -1)
    for idx, (w, b) in enumerate(model.raw_params):
        ref32 = ref32 @ w.T + b
        if idx < len(model.raw_params) - 1:
            ref32 = jnp.maximum(ref32, 0.0)
    assert jnp.allclose(out, ref32, atol=5e-2, rtol=5e-2)

    print("KERNEL_OK")
</pallas_src>

<mosaic_0001>
module attributes {stable_mosaic.version = 11 : i64} {
  func.func @_mlp_kernel(%arg0: i32, %arg1: memref<8x1024xf32, #tpu.memory_space<vmem>>, %arg2: memref<1024x128xbf16, #tpu.memory_space<vmem>>, %arg3: memref<1x128xf32, #tpu.memory_space<vmem>>, %arg4: memref<128x128xbf16, #tpu.memory_space<vmem>>, %arg5: memref<1x128xf32, #tpu.memory_space<vmem>>, %arg6: memref<128x128xbf16, #tpu.memory_space<vmem>>, %arg7: memref<1x128xf32, #tpu.memory_space<vmem>>, %arg8: memref<8x128xf32, #tpu.memory_space<vmem>>) attributes {dimension_semantics = [#tpu.dimension_semantics<parallel>], iteration_bounds = array<i64: 1>, scalar_prefetch = 0 : i64, scratch_operands = 0 : i64, tpu.core_type = #tpu.core_type<tc>, window_params = [{transform_indices = @transform_0, window_bounds = array<i64: 8, 1024>}, {pipeline_mode = #tpu.pipeline_mode<synchronous>, transform_indices = @transform_1, window_bounds = array<i64: 1024, 128>}, {pipeline_mode = #tpu.pipeline_mode<synchronous>, transform_indices = @transform_2, window_bounds = array<i64: 1, 128>}, {pipeline_mode = #tpu.pipeline_mode<synchronous>, transform_indices = @transform_3, window_bounds = array<i64: 128, 128>}, {pipeline_mode = #tpu.pipeline_mode<synchronous>, transform_indices = @transform_4, window_bounds = array<i64: 1, 128>}, {pipeline_mode = #tpu.pipeline_mode<synchronous>, transform_indices = @transform_5, window_bounds = array<i64: 128, 128>}, {pipeline_mode = #tpu.pipeline_mode<synchronous>, transform_indices = @transform_6, window_bounds = array<i64: 1, 128>}, {transform_indices = @transform_7, window_bounds = array<i64: 8, 128>}]} {
    %c0 = arith.constant 0 : index
    %c0_0 = arith.constant 0 : index
    %0 = vector.load %arg1[%c0, %c0_0] : memref<8x1024xf32, #tpu.memory_space<vmem>>, vector<8x1024xf32>
    %1 = arith.truncf %0 : vector<8x1024xf32> to vector<8x1024xbf16>
    %c0_1 = arith.constant 0 : index
    %c0_2 = arith.constant 0 : index
    %2 = vector.load %arg2[%c0_1, %c0_2] : memref<1024x128xbf16, #tpu.memory_space<vmem>>, vector<1024x128xbf16>
    %cst = arith.constant dense<0.000000e+00> : vector<8x128xf32>
    %3 = tpu.matmul %1, %2, %cst {dimension_numbers = #tpu.dot_dimension_numbers<[1], [0], [0], [1], [0, 0, 1, 1], [], []>} : vector<8x1024xbf16>, vector<1024x128xbf16>, vector<8x128xf32> -> vector<8x128xf32>
    %c0_3 = arith.constant 0 : index
    %c0_4 = arith.constant 0 : index
    %4 = vector.load %arg3[%c0_3, %c0_4] : memref<1x128xf32, #tpu.memory_space<vmem>>, vector<1x128xf32>
    %5 = vector.broadcast %4 : vector<1x128xf32> to vector<8x128xf32>
    %6 = arith.addf %3, %5 : vector<8x128xf32>
    %cst_5 = arith.constant 0.000000e+00 : f32
    %7 = vector.broadcast %cst_5 : f32 to vector<8x128xf32>
    %8 = arith.maximumf %6, %7 : vector<8x128xf32>
    %9 = arith.truncf %8 : vector<8x128xf32> to vector<8x128xbf16>
    %c0_6 = arith.constant 0 : index
    %c0_7 = arith.constant 0 : index
    %10 = vector.load %arg4[%c0_6, %c0_7] : memref<128x128xbf16, #tpu.memory_space<vmem>>, vector<128x128xbf16>
    %cst_8 = arith.constant dense<0.000000e+00> : vector<8x128xf32>
    %11 = tpu.matmul %9, %10, %cst_8 {dimension_numbers = #tpu.dot_dimension_numbers<[1], [0], [0], [1], [0, 0, 1, 1], [], []>} : vector<8x128xbf16>, vector<128x128xbf16>, vector<8x128xf32> -> vector<8x128xf32>
    %c0_9 = arith.constant 0 : index
    %c0_10 = arith.constant 0 : index
    %12 = vector.load %arg5[%c0_9, %c0_10] : memref<1x128xf32, #tpu.memory_space<vmem>>, vector<1x128xf32>
    %13 = vector.broadcast %12 : vector<1x128xf32> to vector<8x128xf32>
    %14 = arith.addf %11, %13 : vector<8x128xf32>
    %cst_11 = arith.constant 0.000000e+00 : f32
    %15 = vector.broadcast %cst_11 : f32 to vector<8x128xf32>
    %16 = arith.maximumf %14, %15 : vector<8x128xf32>
    %17 = arith.truncf %16 : vector<8x128xf32> to vector<8x128xbf16>
    %c0_12 = arith.constant 0 : index
    %c0_13 = arith.constant 0 : index
    %18 = vector.load %arg6[%c0_12, %c0_13] : memref<128x128xbf16, #tpu.memory_space<vmem>>, vector<128x128xbf16>
    %cst_14 = arith.constant dense<0.000000e+00> : vector<8x128xf32>
    %19 = tpu.matmul %17, %18, %cst_14 {dimension_numbers = #tpu.dot_dimension_numbers<[1], [0], [0], [1], [0, 0, 1, 1], [], []>} : vector<8x128xbf16>, vector<128x128xbf16>, vector<8x128xf32> -> vector<8x128xf32>
    %c0_15 = arith.constant 0 : index
    %c0_16 = arith.constant 0 : index
    %20 = vector.load %arg7[%c0_15, %c0_16] : memref<1x128xf32, #tpu.memory_space<vmem>>, vector<1x128xf32>
    %21 = vector.broadcast %20 : vector<1x128xf32> to vector<8x128xf32>
    %22 = arith.addf %19, %21 : vector<8x128xf32>
    %c0_17 = arith.constant 0 : index
    %c0_18 = arith.constant 0 : index
    %23 = vector.load %arg8[%c0_17, %c0_18] : memref<8x128xf32, #tpu.memory_space<vmem>>, vector<8x128xf32>
    tpu.vector_store %arg8[%c0_17, %c0_18], %22 {strides = array<i32>} : memref<8x128xf32, #tpu.memory_space<vmem>>, vector<8x128xf32>,
    return
  }
  func.func @transform_0(%arg0: i32) -> (i32, i32) {
    %c0_i32 = arith.constant 0 : i32
    %c0_i32_0 = arith.constant 0 : i32
    return %arg0, %c0_i32 : i32, i32
  }
  func.func @transform_1(%arg0: i32) -> (i32, i32) {
    %c0_i32 = arith.constant 0 : i32
    %c0_i32_0 = arith.constant 0 : i32
    %c0_i32_1 = arith.constant 0 : i32
    return %c0_i32, %c0_i32_0 : i32, i32
  }
  func.func @transform_2(%arg0: i32) -> (i32, i32) {
    %c0_i32 = arith.constant 0 : i32
    %c0_i32_0 = arith.constant 0 : i32
    %c0_i32_1 = arith.constant 0 : i32
    return %c0_i32, %c0_i32_0 : i32, i32
  }
  func.func @transform_3(%arg0: i32) -> (i32, i32) {
    %c0_i32 = arith.constant 0 : i32
    %c0_i32_0 = arith.constant 0 : i32
    %c0_i32_1 = arith.constant 0 : i32
    return %c0_i32, %c0_i32_0 : i32, i32
  }
  func.func @transform_4(%arg0: i32) -> (i32, i32) {
    %c0_i32 = arith.constant 0 : i32
    %c0_i32_0 = arith.constant 0 : i32
    %c0_i32_1 = arith.constant 0 : i32
    return %c0_i32, %c0_i32_0 : i32, i32
  }
  func.func @transform_5(%arg0: i32) -> (i32, i32) {
    %c0_i32 = arith.constant 0 : i32
    %c0_i32_0 = arith.constant 0 : i32
    %c0_i32_1 = arith.constant 0 : i32
    return %c0_i32, %c0_i32_0 : i32, i32
  }
  func.func @transform_6(%arg0: i32) -> (i32, i32) {
    %c0_i32 = arith.constant 0 : i32
    %c0_i32_0 = arith.constant 0 : i32
    %c0_i32_1 = arith.constant 0 : i32
    return %c0_i32, %c0_i32_0 : i32, i32
  }
  func.func @transform_7(%arg0: i32) -> (i32, i32) {
    %c0_i32 = arith.constant 0 : i32
    %c0_i32_0 = arith.constant 0 : i32
    return %arg0, %c0_i32 : i32, i32
  }
}

</mosaic_0001>

<llo_original>
// kernel: _fused_forward.1
$region0: #{_fused_forward.1}
  #allocation0 [shape = 'u32[]', space=smem, size = 0x4, offset = 0x4, fixed_abs, tag = 'smem constant byte address 0x4 - core index']
  #allocation1 [shape = 'u32[144,128]{1,0:T(1,128)}', space=vmem, size = 0x12000, scoped, tag = 'internal scratch']
  %s0 = inlined_call_operand.vmem [shape: f32[2,1024], index: 0, kind: input, shape index: {}]
  %s1 = inlined_call_operand.hbm [shape: bf16[1024,128], index: 1, kind: input, shape index: {}]
  %s2 = inlined_call_operand.vmem [shape: f32[1,128], index: 2, kind: input, shape index: {}]
  %s3 = inlined_call_operand.vmem [shape: bf16[128,128], index: 3, kind: input, shape index: {}]
  %s4 = inlined_call_operand.vmem [shape: f32[1,128], index: 4, kind: input, shape index: {}]
  %s5 = inlined_call_operand.vmem [shape: bf16[128,128], index: 5, kind: input, shape index: {}]
  %s6 = inlined_call_operand.vmem [shape: f32[1,128], index: 6, kind: input, shape index: {}]
  %s7 = inlined_call_operand.hbm [shape: f32[2,128], index: 7, kind: output, shape index: {}]
  %s8 = sld [smem:[#allocation0]]
  $region42: #{_fused_forward.1} parent=0
    _
  %s10 = ssub.s32 1, %s8
  %s11 = scalar_select 0, %s10, %s8
  $region1: #{_fused_forward.1} parent=0
    #allocation2 [shape = 'u8[262144]{0}', space=vmem, size = 0x40000, scoped, tag = 'input window, operand 1, single buffered']
    #allocation3 [shape = 's32[1]{0}', space=sflag, size = 0x4, scoped, tag = 'scoped memory for _fused_forward.1']
    #allocation4 [shape = 's32[1]{0}', space=sflag, size = 0x4, scoped, tag = 'scoped memory for _fused_forward.1']
    #allocation5 [shape = 'u8[4096]{0}', space=vmem, size = 0x1000, scoped, tag = 'output window, operand 0, single buffered']
    %12 = vsyncpa [#allocation3], 0
    %13 = vsyncpa [#allocation4], 0
    // Predicated region
    $region2: #{_fused_forward.1} parent=1 // pred_check
      _
    $region3: #{_fused_forward.1} parent=1 // pred_check_branch
      %15 = sbr.rel (0) target = $region5
    $region4: #{_fused_forward.1} parent=1 // pred_region
      _
    $region5: #{_fused_forward.1} parent=1 // pred_fallthru
      _
    // Predicated region
    $region6: #{_fused_forward.1} parent=1 // pred_check
      _
    $region7: #{_fused_forward.1} parent=1 // pred_check_branch
      %17 = sbr.rel (0) target = $region9
    $region8: #{_fused_forward.1} parent=1 // pred_region
      %s19 = ssub.s32 8192, 8192
      %20 = vsyncadd [#allocation3], %s19
      %s21 = sshll.u32 [#allocation2], 4
      %s22 = int_to_ptr.vmem [resolvable:$true] %s21
      %27 = dma.hbm_to_vmem [thread:$0]  %s1, 8192, %s22, [#allocation3], 64, 64, 4
    $region9: #{_fused_forward.1} parent=1 // pred_fallthru
      _
    // Predicated region
    $region10: #{_fused_forward.1} parent=1 // pred_check
      _
    $region11: #{_fused_forward.1} parent=1 // pred_check_branch
      %29 = sbr.rel (0) target = $region13
    $region12: #{_fused_forward.1} parent=1 // pred_region
      _
    $region13: #{_fused_forward.1} parent=1 // pred_fallthru
      _
    // Predicated region
    $region14: #{_fused_forward.1} parent=1 // pred_check
      _
    $region15: #{_fused_forward.1} parent=1 // pred_check_branch
      %31 = sbr.rel (0) target = $region17
    $region16: #{_fused_forward.1} parent=1 // pred_region
      _
    $region17: #{_fused_forward.1} parent=1 // pred_fallthru
      _
    // Predicated region
    $region18: #{_fused_forward.1} parent=1 // pred_check
      _
    $region19: #{_fused_forward.1} parent=1 // pred_check_branch
      %33 = sbr.rel (0) target = $region21
    $region20: #{_fused_forward.1} parent=1 // pred_region
      _
    $region21: #{_fused_forward.1} parent=1 // pred_fallthru
      _
    // Predicated region
    $region22: #{_fused_forward.1} parent=1 // pred_check
      _
    $region23: #{_fused_forward.1} parent=1 // pred_check_branch
      %35 = sbr.rel (0) target = $region25
    $region24: #{_fused_forward.1} parent=1 // pred_region
      _
    $region25: #{_fused_forward.1} parent=1 // pred_fallthru
      _
    // Predicated region
    $region26: #{_fused_forward.1} parent=1 // pred_check
      _
    $region27: #{_fused_forward.1} parent=1 // pred_check_branch
      %37 = sbr.rel (0) target = $region29
    $region28: #{_fused_forward.1} parent=1 // pred_region
      _
    $region29: #{_fused_forward.1} parent=1 // pred_fallthru
      _
    // Predicated region
    $region30: #{_fused_forward.1} parent=1 // pred_check
      _
    $region31: #{_fused_forward.1} parent=1 // pred_check_branch
      %39 = sbr.rel (0) target = $region33
    $region32: #{_fused_forward.1} parent=1 // pred_region
      %40 = dma.done [#allocation3], 8192
    $region33: #{_fused_forward.1} parent=1 // pred_fallthru
      _
    %v42 = vld [vmem:[%s0] sm:$0xff]
    %v43 = vld [vmem:[%s0 + $0x8] sm:$0xff]
    %v44 = vld [vmem:[%s0 + $0x10] sm:$0xff]
    %v45 = vld [vmem:[%s0 + $0x18] sm:$0xff]
    %v46 = vld [vmem:[%s0 + $0x20] sm:$0xff]
    %v47 = vld [vmem:[%s0 + $0x28] sm:$0xff]
    %v48 = vld [vmem:[%s0 + $0x30] sm:$0xff]
    %v49 = vld [vmem:[%s0 + $0x38] sm:$0xff]
    %v58 = vcombine.low %v42, %v44
    %v59 = vcombine.high %v42, %v44
    %v60 = vcombine.low %v46, %v48
    %v61 = vcombine.high %v46, %v48
    %v63 = vunpack.c.l.s4 1983009808
    %v64 = vunpack.c.0.s8 %v63
    %v65 = vlaneseq
    %v66 = vshrl.u32 %v65, 7
    %v67 = vsub.s32 %v64, %v66
    %v68 = vrot.slane %v58, %v67
    %v70 = vunpack.c.l.s4 1983009808
    %v71 = vunpack.c.0.s8 %v70
    %v72 = vlaneseq
    %v73 = vshrl.u32 %v72, 7
    %v74 = vsub.s32 %v71, %v73
    %v75 = vrot.slane %v59, %v74
    %v77 = vunpack.c.l.s4 1983009808
    %v78 = vunpack.c.0.s8 %v77
    %v79 = vlaneseq
    %v80 = vshrl.u32 %v79, 7
    %v81 = vsub.s32 %v78, %v80
    %v82 = vrot.slane %v60, %v81
    %v84 = vunpack.c.l.s4 1983009808
    %v85 = vunpack.c.0.s8 %v84
    %v86 = vlaneseq
    %v87 = vshrl.u32 %v86, 7
    %v88 = vsub.s32 %v85, %v87
    %v89 = vrot.slane %v61, %v88
    %v90 = vcombine.low %v68, %v82
    %v91 = vcombine.high %v68, %v82
    %v92 = vcombine.low %v75, %v89
    %v93 = vcombine.high %v75, %v89
    %v94 = vcombine.low %v43, %v45
    %v95 = vcombine.high %v43, %v45
    %v96 = vcombine.low %v47, %v49
    %v97 = vcombine.high %v47, %v49
    %v99 = vunpack.c.l.s4 1983009808
    %v100 = vunpack.c.0.s8 %v99
    %v101 = vlaneseq
    %v102 = vshrl.u32 %v101, 7
    %v103 = vsub.s32 %v100, %v102
    %v104 = vrot.slane %v94, %v103
    %v106 = vunpack.c.l.s4 1983009808
    %v107 = vunpack.c.0.s8 %v106
    %v108 = vlaneseq
    %v109 = vshrl.u32 %v108, 7
    %v110 = vsub.s32 %v107, %v109
    %v111 = vrot.slane %v95, %v110
    %v113 = vunpack.c.l.s4 1983009808
    %v114 = vunpack.c.0.s8 %v113
    %v115 = vlaneseq
    %v116 = vshrl.u32 %v115, 7
    %v117 = vsub.s32 %v114, %v116
    %v118 = vrot.slane %v96, %v117
    %v120 = vunpack.c.l.s4 1983009808
    %v121 = vunpack.c.0.s8 %v120
    %v122 = vlaneseq
    %v123 = vshrl.u32 %v122, 7
    %v124 = vsub.s32 %v121, %v123
    %v125 = vrot.slane %v97, %v124
    %v126 = vcombine.low %v104, %v118
    %v127 = vcombine.high %v104, %v118
    %v128 = vcombine.low %v111, %v125
    %v129 = vcombine.high %v111, %v125
    %v138 = vpack.c.bf16 %v90, %v90
    %v139 = vpack.c.bf16 %v91, %v91
    %v140 = vpack.c.bf16 %v92, %v92
    %v141 = vpack.c.bf16 %v93, %v93
    %v142 = vpack.c.bf16 %v126, %v126
    %v143 = vpack.c.bf16 %v127, %v127
    %v144 = vpack.c.bf16 %v128, %v128
    %v145 = vpack.c.bf16 %v129, %v129
    %v146 = vld [vmem:[#allocation2] sm:$0xf]
    %v147 = vld [vmem:[#allocation2 + $0x4] sm:$0xf]
    %v148 = vld [vmem:[#allocation2 + $0x8] sm:$0xf]
    %v149 = vld [vmem:[#allocation2 + $0xc] sm:$0xf]
    %v150 = vld [vmem:[#allocation2 + $0x10] sm:$0xf]
    %v151 = vld [vmem:[#allocation2 + $0x14] sm:$0xf]
    %v152 = vld [vmem:[#allocation2 + $0x18] sm:$0xf]
    %v153 = vld [vmem:[#allocation2 + $0x1c] sm:$0xf]
    %v154 = vld [vmem:[#allocation2 + $0x20] sm:$0xf]
    %v155 = vld [vmem:[#allocation2 + $0x24] sm:$0xf]
    %v156 = vld [vmem:[#allocation2 + $0x28] sm:$0xf]
    %v157 = vld [vmem:[#allocation2 + $0x2c] sm:$0xf]
    %v158 = vld [vmem:[#allocation2 + $0x30] sm:$0xf]
    %v159 = vld [vmem:[#allocation2 + $0x34] sm:$0xf]
    %v160 = vld [vmem:[#allocation2 + $0x38] sm:$0xf]
    %v161 = vld [vmem:[#allocation2 + $0x3c] sm:$0xf]
    %v162 = vld [vmem:[#allocation2 + $0x40] sm:$0xf]
    %v163 = vld [vmem:[#allocation2 + $0x44] sm:$0xf]
    %v164 = vld [vmem:[#allocation2 + $0x48] sm:$0xf]
    %v165 = vld [vmem:[#allocation2 + $0x4c] sm:$0xf]
    %v166 = vld [vmem:[#allocation2 + $0x50] sm:$0xf]
    %v167 = vld [vmem:[#allocation2 + $0x54] sm:$0xf]
    %v168 = vld [vmem:[#allocation2 + $0x58] sm:$0xf]
    %v169 = vld [vmem:[#allocation2 + $0x5c] sm:$0xf]
    %v170 = vld [vmem:[#allocation2 + $0x60] sm:$0xf]
    %v171 = vld [vmem:[#allocation2 + $0x64] sm:$0xf]
    %v172 = vld [vmem:[#allocation2 + $0x68] sm:$0xf]
    %v173 = vld [vmem:[#allocation2 + $0x6c] sm:$0xf]
    %v174 = vld [vmem:[#allocation2 + $0x70] sm:$0xf]
    %v175 = vld [vmem:[#allocation2 + $0x74] sm:$0xf]
    %v176 = vld [vmem:[#allocation2 + $0x78] sm:$0xf]
    %v177 = vld [vmem:[#allocation2 + $0x7c] sm:$0xf]
    %v178 = vld [vmem:[#allocation2 + $0x80] sm:$0xf]
    %v179 = vld [vmem:[#allocation2 + $0x84] sm:$0xf]
    %v180 = vld [vmem:[#allocation2 + $0x88] sm:$0xf]
    %v181 = vld [vmem:[#allocation2 + $0x8c] sm:$0xf]
    %v182 = vld [vmem:[#allocation2 + $0x90] sm:$0xf]
    %v183 = vld [vmem:[#allocation2 + $0x94] sm:$0xf]
    %v184 = vld [vmem:[#allocation2 + $0x98] sm:$0xf]
    %v185 = vld [vmem:[#allocation2 + $0x9c] sm:$0xf]
    %v186 = vld [vmem:[#allocation2 + $0xa0] sm:$0xf]
    %v187 = vld [vmem:[#allocation2 + $0xa4] sm:$0xf]
    %v188 = vld [vmem:[#allocation2 + $0xa8] sm:$0xf]
    %v189 = vld [vmem:[#allocation2 + $0xac] sm:$0xf]
    %v190 = vld [vmem:[#allocation2 + $0xb0] sm:$0xf]
    %v191 = vld [vmem:[#allocation2 + $0xb4] sm:$0xf]
    %v192 = vld [vmem:[#allocation2 + $0xb8] sm:$0xf]
    %v193 = vld [vmem:[#allocation2 + $0xbc] sm:$0xf]
    %v194 = vld [vmem:[#allocation2 + $0xc0] sm:$0xf]
    %v195 = vld [vmem:[#allocation2 + $0xc4] sm:$0xf]
    %v196 = vld [vmem:[#allocation2 + $0xc8] sm:$0xf]
    %v197 = vld [vmem:[#allocation2 + $0xcc] sm:$0xf]
    %v198 = vld [vmem:[#allocation2 + $0xd0] sm:$0xf]
    %v199 = vld [vmem:[#allocation2 + $0xd4] sm:$0xf]
    %v200 = vld [vmem:[#allocation2 + $0xd8] sm:$0xf]
    %v201 = vld [vmem:[#allocation2 + $0xdc] sm:$0xf]
    %v202 = vld [vmem:[#allocation2 + $0xe0] sm:$0xf]
    %v203 = vld [vmem:[#allocation2 + $0xe4] sm:$0xf]
    %v204 = vld [vmem:[#allocation2 + $0xe8] sm:$0xf]
    %v205 = vld [vmem:[#allocation2 + $0xec] sm:$0xf]
    %v206 = vld [vmem:[#allocation2 + $0xf0] sm:$0xf]
    %v207 = vld [vmem:[#allocation2 + $0xf4] sm:$0xf]
    %v208 = vld [vmem:[#allocation2 + $0xf8] sm:$0xf]
    %v209 = vld [vmem:[#allocation2 + $0xfc] sm:$0xf]
    %v210 = vld [vmem:[#allocation2 + $0x100] sm:$0xf]
    %v211 = vld [vmem:[#allocation2 + $0x104] sm:$0xf]
    %v212 = vld [vmem:[#allocation2 + $0x108] sm:$0xf]
    %v213 = vld [vmem:[#allocation2 + $0x10c] sm:$0xf]
    %v214 = vld [vmem:[#allocation2 + $0x110] sm:$0xf]
    %v215 = vld [vmem:[#allocation2 + $0x114] sm:$0xf]
    %v216 = vld [vmem:[#allocation2 + $0x118] sm:$0xf]
    %v217 = vld [vmem:[#allocation2 + $0x11c] sm:$0xf]
    %v218 = vld [vmem:[#allocation2 + $0x120] sm:$0xf]
    %v219 = vld [vmem:[#allocation2 + $0x124] sm:$0xf]
    %v220 = vld [vmem:[#allocation2 + $0x128] sm:$0xf]
    %v221 = vld [vmem:[#allocation2 + $0x12c] sm:$0xf]
    %v222 = vld [vmem:[#allocation2 + $0x130] sm:$0xf]
    %v223 = vld [vmem:[#allocation2 + $0x134] sm:$0xf]
    %v224 = vld [vmem:[#allocation2 + $0x138] sm:$0xf]
    %v225 = vld [vmem:[#allocation2 + $0x13c] sm:$0xf]
    %v226 = vld [vmem:[#allocation2 + $0x140] sm:$0xf]
    %v227 = vld [vmem:[#allocation2 + $0x144] sm:$0xf]
    %v228 = vld [vmem:[#allocation2 + $0x148] sm:$0xf]
    %v229 = vld [vmem:[#allocation2 + $0x14c] sm:$0xf]
    %v230 = vld [vmem:[#allocation2 + $0x150] sm:$0xf]
    %v231 = vld [vmem:[#allocation2 + $0x154] sm:$0xf]
    %v232 = vld [vmem:[#allocation2 + $0x158] sm:$0xf]
    %v233 = vld [vmem:[#allocation2 + $0x15c] sm:$0xf]
    %v234 = vld [vmem:[#allocation2 + $0x160] sm:$0xf]
    %v235 = vld [vmem:[#allocation2 + $0x164] sm:$0xf]
    %v236 = vld [vmem:[#allocation2 + $0x168] sm:$0xf]
    %v237 = vld [vmem:[#allocation2 + $0x16c] sm:$0xf]
    %v238 = vld [vmem:[#allocation2 + $0x170] sm:$0xf]
    %v239 = vld [vmem:[#allocation2 + $0x174] sm:$0xf]
    %v240 = vld [vmem:[#allocation2 + $0x178] sm:$0xf]
    %v241 = vld [vmem:[#allocation2 + $0x17c] sm:$0xf]
    %v242 = vld [vmem:[#allocation2 + $0x180] sm:$0xf]
    %v243 = vld [vmem:[#allocation2 + $0x184] sm:$0xf]
    %v244 = vld [vmem:[#allocation2 + $0x188] sm:$0xf]
    %v245 = vld [vmem:[#allocation2 + $0x18c] sm:$0xf]
    %v246 = vld [vmem:[#allocation2 + $0x190] sm:$0xf]
    %v247 = vld [vmem:[#allocation2 + $0x194] sm:$0xf]
    %v248 = vld [vmem:[#allocation2 + $0x198] sm:$0xf]
    %v249 = vld [vmem:[#allocation2 + $0x19c] sm:$0xf]
    %v250 = vld [vmem:[#allocation2 + $0x1a0] sm:$0xf]
    %v251 = vld [vmem:[#allocation2 + $0x1a4] sm:$0xf]
    %v252 = vld [vmem:[#allocation2 + $0x1a8] sm:$0xf]
    %v253 = vld [vmem:[#allocation2 + $0x1ac] sm:$0xf]
    %v254 = vld [vmem:[#allocation2 + $0x1b0] sm:$0xf]
    %v255 = vld [vmem:[#allocation2 + $0x1b4] sm:$0xf]
    %v256 = vld [vmem:[#allocation2 + $0x1b8] sm:$0xf]
    %v257 = vld [vmem:[#allocation2 + $0x1bc] sm:$0xf]
    %v258 = vld [vmem:[#allocation2 + $0x1c0] sm:$0xf]
    %v259 = vld [vmem:[#allocation2 + $0x1c4] sm:$0xf]
    %v260 = vld [vmem:[#allocation2 + $0x1c8] sm:$0xf]
    %v261 = vld [vmem:[#allocation2 + $0x1cc] sm:$0xf]
    %v262 = vld [vmem:[#allocation2 + $0x1d0] sm:$0xf]
    %v263 = vld [vmem:[#allocation2 + $0x1d4] sm:$0xf]
    %v264 = vld [vmem:[#allocation2 + $0x1d8] sm:$0xf]
    %v265 = vld [vmem:[#allocation2 + $0x1dc] sm:$0xf]
    %v266 = vld [vmem:[#allocation2 + $0x1e0] sm:$0xf]
    %v267 = vld [vmem:[#allocation2 + $0x1e4] sm:$0xf]
    %v268 = vld [vmem:[#allocation2 + $0x1e8] sm:$0xf]
    %v269 = vld [vmem:[#allocation2 + $0x1ec] sm:$0xf]
    %v270 = vld [vmem:[#allocation2 + $0x1f0] sm:$0xf]
    %v271 = vld [vmem:[#allocation2 + $0x1f4] sm:$0xf]
    %v272 = vld [vmem:[#allocation2 + $0x1f8] sm:$0xf]
    %v273 = vld [vmem:[#allocation2 + $0x1fc] sm:$0xf]
    %v274 = vld [vmem:[%s2] sm:$0x1]
    %v276 = vlaneseq
    %v277 = vshrl.u32 %v276, 7
    %v278 = vsub.s32 0, %v277
    %v279 = vrot.slane %v274, %v278
    %v409 = vunpack.c.l.b16 %v146
    %v410 = vunpack.c.l.b16 %v147
    %v411 = vunpack.c.l.b16 %v148
    %v412 = vunpack.c.l.b16 %v149
    %v413 = vunpack.c.l.b16 %v150
    %v414 = vunpack.c.l.b16 %v151
    %v415 = vunpack.c.l.b16 %v152
    %v416 = vunpack.c.l.b16 %v153
    %v417 = vunpack.c.l.b16 %v154
    %v418 = vunpack.c.l.b16 %v155
    %v419 = vunpack.c.l.b16 %v156
    %v420 = vunpack.c.l.b16 %v157
    %v421 = vunpack.c.l.b16 %v158
    %v422 = vunpack.c.l.b16 %v159
    %v423 = vunpack.c.l.b16 %v160
    %v424 = vunpack.c.l.b16 %v161
    %v425 = vunpack.c.l.b16 %v162
    %v426 = vunpack.c.l.b16 %v163
    %v427 = vunpack.c.l.b16 %v164
    %v428 = vunpack.c.l.b16 %v165
    %v429 = vunpack.c.l.b16 %v166
    %v430 = vunpack.c.l.b16 %v167
    %v431 = vunpack.c.l.b16 %v168
    %v432 = vunpack.c.l.b16 %v169
    %v433 = vunpack.c.l.b16 %v170
    %v434 = vunpack.c.l.b16 %v171
    %v435 = vunpack.c.l.b16 %v172
    %v436 = vunpack.c.l.b16 %v173
    %v437 = vunpack.c.l.b16 %v174
    %v438 = vunpack.c.l.b16 %v175
    %v439 = vunpack.c.l.b16 %v176
    %v440 = vunpack.c.l.b16 %v177
    %v441 = vunpack.c.l.b16 %v178
    %v442 = vunpack.c.l.b16 %v179
    %v443 = vunpack.c.l.b16 %v180
    %v444 = vunpack.c.l.b16 %v181
    %v445 = vunpack.c.l.b16 %v182
    %v446 = vunpack.c.l.b16 %v183
    %v447 = vunpack.c.l.b16 %v184
    %v448 = vunpack.c.l.b16 %v185
    %v449 = vunpack.c.l.b16 %v186
    %v450 = vunpack.c.l.b16 %v187
    %v451 = vunpack.c.l.b16 %v188
    %v452 = vunpack.c.l.b16 %v189
    %v453 = vunpack.c.l.b16 %v190
    %v454 = vunpack.c.l.b16 %v191
    %v455 = vunpack.c.l.b16 %v192
    %v456 = vunpack.c.l.b16 %v193
    %v457 = vunpack.c.l.b16 %v194
    %v458 = vunpack.c.l.b16 %v195
    %v459 = vunpack.c.l.b16 %v196
    %v460 = vunpack.c.l.b16 %v197
    %v461 = vunpack.c.l.b16 %v198
    %v462 = vunpack.c.l.b16 %v199
    %v463 = vunpack.c.l.b16 %v200
    %v464 = vunpack.c.l.b16 %v201
    %v465 = vunpack.c.l.b16 %v202
    %v466 = vunpack.c.l.b16 %v203
    %v467 = vunpack.c.l.b16 %v204
    %v468 = vunpack.c.l.b16 %v205
    %v469 = vunpack.c.l.b16 %v206
    %v470 = vunpack.c.l.b16 %v207
    %v471 = vunpack.c.l.b16 %v208
    %v472 = vunpack.c.l.b16 %v209
    %v473 = vunpack.c.l.b16 %v210
    %v474 = vunpack.c.l.b16 %v211
    %v475 = vunpack.c.l.b16 %v212
    %v476 = vunpack.c.l.b16 %v213
    %v477 = vunpack.c.l.b16 %v214
    %v478 = vunpack.c.l.b16 %v215
    %v479 = vunpack.c.l.b16 %v216
    %v480 = vunpack.c.l.b16 %v217
    %v481 = vunpack.c.l.b16 %v218
    %v482 = vunpack.c.l.b16 %v219
    %v483 = vunpack.c.l.b16 %v220
    %v484 = vunpack.c.l.b16 %v221
    %v485 = vunpack.c.l.b16 %v222
    %v486 = vunpack.c.l.b16 %v223
    %v487 = vunpack.c.l.b16 %v224
    %v488 = vunpack.c.l.b16 %v225
    %v489 = vunpack.c.l.b16 %v226
    %v490 = vunpack.c.l.b16 %v227
    %v491 = vunpack.c.l.b16 %v228
    %v492 = vunpack.c.l.b16 %v229
    %v493 = vunpack.c.l.b16 %v230
    %v494 = vunpack.c.l.b16 %v231
    %v495 = vunpack.c.l.b16 %v232
    %v496 = vunpack.c.l.b16 %v233
    %v497 = vunpack.c.l.b16 %v234
    %v498 = vunpack.c.l.b16 %v235
    %v499 = vunpack.c.l.b16 %v236
    %v500 = vunpack.c.l.b16 %v237
    %v501 = vunpack.c.l.b16 %v238
    %v502 = vunpack.c.l.b16 %v239
    %v503 = vunpack.c.l.b16 %v240
    %v504 = vunpack.c.l.b16 %v241
    %v505 = vunpack.c.l.b16 %v242
    %v506 = vunpack.c.l.b16 %v243
    %v507 = vunpack.c.l.b16 %v244
    %v508 = vunpack.c.l.b16 %v245
    %v509 = vunpack.c.l.b16 %v246
    %v510 = vunpack.c.l.b16 %v247
    %v511 = vunpack.c.l.b16 %v248
    %v512 = vunpack.c.l.b16 %v249
    %v513 = vunpack.c.l.b16 %v250
    %v514 = vunpack.c.l.b16 %v251
    %v515 = vunpack.c.l.b16 %v252
    %v516 = vunpack.c.l.b16 %v253
    %v517 = vunpack.c.l.b16 %v254
    %v518 = vunpack.c.l.b16 %v255
    %v519 = vunpack.c.l.b16 %v256
    %v520 = vunpack.c.l.b16 %v257
    %v521 = vunpack.c.l.b16 %v258
    %v522 = vunpack.c.l.b16 %v259
    %v523 = vunpack.c.l.b16 %v260
    %v524 = vunpack.c.l.b16 %v261
    %v525 = vunpack.c.l.b16 %v262
    %v526 = vunpack.c.l.b16 %v263
    %v527 = vunpack.c.l.b16 %v264
    %v528 = vunpack.c.l.b16 %v265
    %v529 = vunpack.c.l.b16 %v266
    %v530 = vunpack.c.l.b16 %v267
    %v531 = vunpack.c.l.b16 %v268
    %v532 = vunpack.c.l.b16 %v269
    %v533 = vunpack.c.l.b16 %v270
    %v534 = vunpack.c.l.b16 %v271
    %v535 = vunpack.c.l.b16 %v272
    %v536 = vunpack.c.l.b16 %v273
    %v537 = vpack.c.b16 %v410, %v409
    %v538 = vpack.c.b16 %v412, %v411
    %v539 = vpack.c.b16 %v414, %v413
    %v540 = vpack.c.b16 %v416, %v415
    %v541 = vpack.c.b16 %v418, %v417
    %v542 = vpack.c.b16 %v420, %v419
    %v543 = vpack.c.b16 %v422, %v421
    %v544 = vpack.c.b16 %v424, %v423
    %v545 = vpack.c.b16 %v426, %v425
    %v546 = vpack.c.b16 %v428, %v427
    %v547 = vpack.c.b16 %v430, %v429
    %v548 = vpack.c.b16 %v432, %v431
    %v549 = vpack.c.b16 %v434, %v433
    %v550 = vpack.c.b16 %v436, %v435
    %v551 = vpack.c.b16 %v438, %v437
    %v552 = vpack.c.b16 %v440, %v439
    %v553 = vpack.c.b16 %v442, %v441
    %v554 = vpack.c.b16 %v444, %v443
    %v555 = vpack.c.b16 %v446, %v445
    %v556 = vpack.c.b16 %v448, %v447
    %v557 = vpack.c.b16 %v450, %v449
    %v558 = vpack.c.b16 %v452, %v451
    %v559 = vpack.c.b16 %v454, %v453
    %v560 = vpack.c.b16 %v456, %v455
    %v561 = vpack.c.b16 %v458, %v457
    %v562 = vpack.c.b16 %v460, %v459
    %v563 = vpack.c.b16 %v462, %v461
    %v564 = vpack.c.b16 %v464, %v463
    %v565 = vpack.c.b16 %v466, %v465
    %v566 = vpack.c.b16 %v468, %v467
    %v567 = vpack.c.b16 %v470, %v469
    %v568 = vpack.c.b16 %v472, %v471
    %v569 = vpack.c.b16 %v474, %v473
    %v570 = vpack.c.b16 %v476, %v475
    %v571 = vpack.c.b16 %v478, %v477
    %v572 = vpack.c.b16 %v480, %v479
    %v573 = vpack.c.b16 %v482, %v481
    %v574 = vpack.c.b16 %v484, %v483
    %v575 = vpack.c.b16 %v486, %v485
    %v576 = vpack.c.b16 %v488, %v487
    %v577 = vpack.c.b16 %v490, %v489
    %v578 = vpack.c.b16 %v492, %v491
    %v579 = vpack.c.b16 %v494, %v493
    %v580 = vpack.c.b16 %v496, %v495
    %v581 = vpack.c.b16 %v498, %v497
    %v582 = vpack.c.b16 %v500, %v499
    %v583 = vpack.c.b16 %v502, %v501
    %v584 = vpack.c.b16 %v504, %v503
    %v585 = vpack.c.b16 %v506, %v505
    %v586 = vpack.c.b16 %v508, %v507
    %v587 = vpack.c.b16 %v510, %v509
    %v588 = vpack.c.b16 %v512, %v511
    %v589 = vpack.c.b16 %v514, %v513
    %v590 = vpack.c.b16 %v516, %v515
    %v591 = vpack.c.b16 %v518, %v517
    %v592 = vpack.c.b16 %v520, %v519
    %v593 = vpack.c.b16 %v522, %v521
    %v594 = vpack.c.b16 %v524, %v523
    %v595 = vpack.c.b16 %v526, %v525
    %v596 = vpack.c.b16 %v528, %v527
    %v597 = vpack.c.b16 %v530, %v529
    %v598 = vpack.c.b16 %v532, %v531
    %v599 = vpack.c.b16 %v534, %v533
    %v600 = vpack.c.b16 %v536, %v535
    %665 = vmatprep.subr.bf16.mxu0 0
    %666 = vmatpush1.bf16.msra.mxu0 %v537
    %667 = vmatprep.subr.bf16.mxu0 0
    %668 = vmatpush1.bf16.msra.mxu0 %v538
    %669 = vmatprep.subr.bf16.mxu0 0
    %670 = vmatpush1.bf16.msra.mxu0 %v539
    %671 = vmatprep.subr.bf16.mxu0 0
    %672 = vmatpush1.bf16.msra.mxu0 %v540
    %673 = vmatprep.subr.bf16.mxu0 0
    %674 = vmatpush1.bf16.msra.mxu0 %v541
    %675 = vmatprep.subr.bf16.mxu0 0
    %676 = vmatpush1.bf16.msra.mxu0 %v542
    %677 = vmatprep.subr.bf16.mxu0 0
    %678 = vmatpush1.bf16.msra.mxu0 %v543
    %679 = vmatprep.subr.bf16.mxu0 0
    %680 = vmatpush1.bf16.msra.mxu0 %v544
    %681 = vmatprep.subr.bf16.mxu0 0
    %682 = vmatpush1.bf16.msra.mxu0 %v545
    %683 = vmatprep.subr.bf16.mxu0 0
    %684 = vmatpush1.bf16.msra.mxu0 %v546
    %685 = vmatprep.subr.bf16.mxu0 0
    %686 = vmatpush1.bf16.msra.mxu0 %v547
    %687 = vmatprep.subr.bf16.mxu0 0
    %688 = vmatpush1.bf16.msra.mxu0 %v548
    %689 = vmatprep.subr.bf16.mxu0 0
    %690 = vmatpush1.bf16.msra.mxu0 %v549
    %691 = vmatprep.subr.bf16.mxu0 0
    %692 = vmatpush1.bf16.msra.mxu0 %v550
    %693 = vmatprep.subr.bf16.mxu0 0
    %694 = vmatpush1.bf16.msra.mxu0 %v551
    %695 = vmatprep.subr.bf16.mxu0 0
    %696 = vmatpush1.bf16.msra.mxu0 %v552
    %697 = vmatprep.mubr.bf16.mxu0 %v139
    %698 = vmatmul.mubr.bf16.gmra.mrb[0].mxu0 %v138
    %v699 = vpop.f32.mrb[0].mxu0
    %v700 = vadd.f32 %v279, %v699
    %v701 = vpop.f32.mrb[0].mxu0
    %v702 = vpop.f32.mrb[0].mxu0
    %v703 = vpop.f32.mrb[0].mxu0
    %704 = vdwg.mxu0
    %705 = vmatprep.subr.bf16.mxu0 0
    %706 = vmatpush1.bf16.msra.mxu0 %v553
    %707 = vmatprep.subr.bf16.mxu0 0
    %708 = vmatpush1.bf16.msra.mxu0 %v554
    %709 = vmatprep.subr.bf16.mxu0 0
    %710 = vmatpush1.bf16.msra.mxu0 %v555
    %711 = vmatprep.subr.bf16.mxu0 0
    %712 = vmatpush1.bf16.msra.mxu0 %v556
    %713 = vmatprep.subr.bf16.mxu0 0
    %714 = vmatpush1.bf16.msra.mxu0 %v557
    %715 = vmatprep.subr.bf16.mxu0 0
    %716 = vmatpush1.bf16.msra.mxu0 %v558
    %717 = vmatprep.subr.bf16.mxu0 0
    %718 = vmatpush1.bf16.msra.mxu0 %v559
    %719 = vmatprep.subr.bf16.mxu0 0
    %720 = vmatpush1.bf16.msra.mxu0 %v560
    %721 = vmatprep.subr.bf16.mxu0 0
    %722 = vmatpush1.bf16.msra.mxu0 %v561
    %723 = vmatprep.subr.bf16.mxu0 0
    %724 = vmatpush1.bf16.msra.mxu0 %v562
    %725 = vmatprep.subr.bf16.mxu0 0
    %726 = vmatpush1.bf16.msra.mxu0 %v563
    %727 = vmatprep.subr.bf16.mxu0 0
    %728 = vmatpush1.bf16.msra.mxu0 %v564
    %729 = vmatprep.subr.bf16.mxu0 0
    %730 = vmatpush1.bf16.msra.mxu0 %v565
    %731 = vmatprep.subr.bf16.mxu0 0
    %732 = vmatpush1.bf16.msra.mxu0 %v566
    %733 = vmatprep.subr.bf16.mxu0 0
    %734 = vmatpush1.bf16.msra.mxu0 %v567
    %735 = vmatprep.subr.bf16.mxu0 0
    %736 = vmatpush1.bf16.msra.mxu0 %v568
    %737 = vmatprep.mubr.bf16.mxu0 %v141
    %738 = vmatmul.mubr.bf16.gmra.mrb[0].mxu0 %v140
    %v739 = vpop.f32.mrb[0].mxu0
    %v740 = vadd.f32 %v700, %v739
    %v741 = vpop.f32.mrb[0].mxu0
    %v742 = vpop.f32.mrb[0].mxu0
    %v743 = vpop.f32.mrb[0].mxu0
    %744 = vdwg.mxu0
    %745 = vmatprep.subr.bf16.mxu0 0
    %746 = vmatpush1.bf16.msra.mxu0 %v569
    %747 = vmatprep.subr.bf16.mxu0 0
    %748 = vmatpush1.bf16.msra.mxu0 %v570
    %749 = vmatprep.subr.bf16.mxu0 0
    %750 = vmatpush1.bf16.msra.mxu0 %v571
    %751 = vmatprep.subr.bf16.mxu0 0
    %752 = vmatpush1.bf16.msra.mxu0 %v572
    %753 = vmatprep.subr.bf16.mxu0 0
    %754 = vmatpush1.bf16.msra.mxu0 %v573
    %755 = vmatprep.subr.bf16.mxu0 0
    %756 = vmatpush1.bf16.msra.mxu0 %v574
    %757 = vmatprep.subr.bf16.mxu0 0
    %758 = vmatpush1.bf16.msra.mxu0 %v575
    %759 = vmatprep.subr.bf16.mxu0 0
    %760 = vmatpush1.bf16.msra.mxu0 %v576
    %761 = vmatprep.subr.bf16.mxu0 0
    %762 = vmatpush1.bf16.msra.mxu0 %v577
    %763 = vmatprep.subr.bf16.mxu0 0
    %764 = vmatpush1.bf16.msra.mxu0 %v578
    %765 = vmatprep.subr.bf16.mxu0 0
    %766 = vmatpush1.bf16.msra.mxu0 %v579
    %767 = vmatprep.subr.bf16.mxu0 0
    %768 = vmatpush1.bf16.msra.mxu0 %v580
    %769 = vmatprep.subr.bf16.mxu0 0
    %770 = vmatpush1.bf16.msra.mxu0 %v581
    %771 = vmatprep.subr.bf16.mxu0 0
    %772 = vmatpush1.bf16.msra.mxu0 %v582
    %773 = vmatprep.subr.bf16.mxu0 0
    %774 = vmatpush1.bf16.msra.mxu0 %v583
    %775 = vmatprep.subr.bf16.mxu0 0
    %776 = vmatpush1.bf16.msra.mxu0 %v584
    %777 = vmatprep.mubr.bf16.mxu0 %v143
    %778 = vmatmul.mubr.bf16.gmra.mrb[0].mxu0 %v142
    %v779 = vpop.f32.mrb[0].mxu0
    %v780 = vadd.f32 %v740, %v779
    %v781 = vpop.f32.mrb[0].mxu0
    %v782 = vpop.f32.mrb[0].mxu0
    %v783 = vpop.f32.mrb[0].mxu0
    %784 = vdwg.mxu0
    %785 = vmatprep.subr.bf16.mxu0 0
    %786 = vmatpush1.bf16.msra.mxu0 %v585
    %787 = vmatprep.subr.bf16.mxu0 0
    %788 = vmatpush1.bf16.msra.mxu0 %v586
    %789 = vmatprep.subr.bf16.mxu0 0
    %790 = vmatpush1.bf16.msra.mxu0 %v587
    %791 = vmatprep.subr.bf16.mxu0 0
    %792 = vmatpush1.bf16.msra.mxu0 %v588
    %793 = vmatprep.subr.bf16.mxu0 0
    %794 = vmatpush1.bf16.msra.mxu0 %v589
    %795 = vmatprep.subr.bf16.mxu0 0
    %796 = vmatpush1.bf16.msra.mxu0 %v590
    %797 = vmatprep.subr.bf16.mxu0 0
    %798 = vmatpush1.bf16.msra.mxu0 %v591
    %799 = vmatprep.subr.bf16.mxu0 0
    %800 = vmatpush1.bf16.msra.mxu0 %v592
    %801 = vmatprep.subr.bf16.mxu0 0
    %802 = vmatpush1.bf16.msra.mxu0 %v593
    %803 = vmatprep.subr.bf16.mxu0 0
    %804 = vmatpush1.bf16.msra.mxu0 %v594
    %805 = vmatprep.subr.bf16.mxu0 0
    %806 = vmatpush1.bf16.msra.mxu0 %v595
    %807 = vmatprep.subr.bf16.mxu0 0
    %808 = vmatpush1.bf16.msra.mxu0 %v596
    %809 = vmatprep.subr.bf16.mxu0 0
    %810 = vmatpush1.bf16.msra.mxu0 %v597
    %811 = vmatprep.subr.bf16.mxu0 0
    %812 = vmatpush1.bf16.msra.mxu0 %v598
    %813 = vmatprep.subr.bf16.mxu0 0
    %814 = vmatpush1.bf16.msra.mxu0 %v599
    %815 = vmatprep.subr.bf16.mxu0 0
    %816 = vmatpush1.bf16.msra.mxu0 %v600
    %817 = vmatprep.mubr.bf16.mxu0 %v145
    %818 = vmatmul.mubr.bf16.gmra.mrb[0].mxu0 %v144
    %v819 = vpop.f32.mrb[0].mxu0
    %v820 = vadd.f32 %v780, %v819
    %v821 = vpop.f32.mrb[0].mxu0
    %v822 = vpop.f32.mrb[0].mxu0
    %v823 = vpop.f32.mrb[0].mxu0
    %824 = vdwg.mxu0
    %v825 = vmax.f32 %v820, 0.0
    %v826 = vpack.c.bf16 %v825, %v825
    %v827 = vld [vmem:[%s3] sm:$0xf]
    %v828 = vld [vmem:[%s3 + $0x4] sm:$0xf]
    %v829 = vld [vmem:[%s3 + $0x8] sm:$0xf]
    %v830 = vld [vmem:[%s3 + $0xc] sm:$0xf]
    %v831 = vld [vmem:[%s3 + $0x10] sm:$0xf]
    %v832 = vld [vmem:[%s3 + $0x14] sm:$0xf]
    %v833 = vld [vmem:[%s3 + $0x18] sm:$0xf]
    %v834 = vld [vmem:[%s3 + $0x1c] sm:$0xf]
    %v835 = vld [vmem:[%s3 + $0x20] sm:$0xf]
    %v836 = vld [vmem:[%s3 + $0x24] sm:$0xf]
    %v837 = vld [vmem:[%s3 + $0x28] sm:$0xf]
    %v838 = vld [vmem:[%s3 + $0x2c] sm:$0xf]
    %v839 = vld [vmem:[%s3 + $0x30] sm:$0xf]
    %v840 = vld [vmem:[%s3 + $0x34] sm:$0xf]
    %v841 = vld [vmem:[%s3 + $0x38] sm:$0xf]
    %v842 = vld [vmem:[%s3 + $0x3c] sm:$0xf]
    %v843 = vld [vmem:[%s4] sm:$0x1]
    %v845 = vlaneseq
    %v846 = vshrl.u32 %v845, 7
    %v847 = vsub.s32 0, %v846
    %v848 = vrot.slane %v843, %v847
    %v866 = vunpack.c.l.b16 %v827
    %v867 = vunpack.c.l.b16 %v828
    %v868 = vunpack.c.l.b16 %v829
    %v869 = vunpack.c.l.b16 %v830
    %v870 = vunpack.c.l.b16 %v831
    %v871 = vunpack.c.l.b16 %v832
    %v872 = vunpack.c.l.b16 %v833
    %v873 = vunpack.c.l.b16 %v834
    %v874 = vunpack.c.l.b16 %v835
    %v875 = vunpack.c.l.b16 %v836
    %v876 = vunpack.c.l.b16 %v837
    %v877 = vunpack.c.l.b16 %v838
    %v878 = vunpack.c.l.b16 %v839
    %v879 = vunpack.c.l.b16 %v840
    %v880 = vunpack.c.l.b16 %v841
    %v881 = vunpack.c.l.b16 %v842
    %v882 = vpack.c.b16 %v867, %v866
    %v883 = vpack.c.b16 %v869, %v868
    %v884 = vpack.c.b16 %v871, %v870
    %v885 = vpack.c.b16 %v873, %v872
    %v886 = vpack.c.b16 %v875, %v874
    %v887 = vpack.c.b16 %v877, %v876
    %v888 = vpack.c.b16 %v879, %v878
    %v889 = vpack.c.b16 %v881, %v880
    %898 = vmatprep.subr.bf16.mxu0 0
    %899 = vmatpush1.bf16.msra.mxu0 %v882
    %900 = vmatprep.subr.bf16.mxu0 0
    %901 = vmatpush1.bf16.msra.mxu0 %v883
    %902 = vmatprep.subr.bf16.mxu0 0
    %903 = vmatpush1.bf16.msra.mxu0 %v884
    %904 = vmatprep.subr.bf16.mxu0 0
    %905 = vmatpush1.bf16.msra.mxu0 %v885
    %906 = vmatprep.subr.bf16.mxu0 0
    %907 = vmatpush1.bf16.msra.mxu0 %v886
    %908 = vmatprep.subr.bf16.mxu0 0
    %909 = vmatpush1.bf16.msra.mxu0 %v887
    %910 = vmatprep.subr.bf16.mxu0 0
    %911 = vmatpush1.bf16.msra.mxu0 %v888
    %912 = vmatprep.subr.bf16.mxu0 0
    %913 = vmatpush1.bf16.msra.mxu0 %v889
    %914 = vmatprep.subr.bf16.mxu0 0
    %915 = vmatpush1.bf16.msra.mxu0 0
    %916 = vmatprep.subr.bf16.mxu0 0
    %917 = vmatpush1.bf16.msra.mxu0 0
    %918 = vmatprep.subr.bf16.mxu0 0
    %919 = vmatpush1.bf16.msra.mxu0 0
    %920 = vmatprep.subr.bf16.mxu0 0
    %921 = vmatpush1.bf16.msra.mxu0 0
    %922 = vmatprep.subr.bf16.mxu0 0
    %923 = vmatpush1.bf16.msra.mxu0 0
    %924 = vmatprep.subr.bf16.mxu0 0
    %925 = vmatpush1.bf16.msra.mxu0 0
    %926 = vmatprep.subr.bf16.mxu0 0
    %927 = vmatpush1.bf16.msra.mxu0 0
    %928 = vmatprep.subr.bf16.mxu0 0
    %929 = vmatpush1.bf16.msra.mxu0 0
    %930 = vmatprep.mubr.bf16.mxu0 0
    %931 = vmatmul.mubr.bf16.gmra.mrb[0].mxu0 %v826
    %v932 = vpop.f32.mrb[0].mxu0
    %v933 = vadd.f32 %v848, %v932
    %v934 = vpop.f32.mrb[0].mxu0
    %v935 = vpop.f32.mrb[0].mxu0
    %v936 = vpop.f32.mrb[0].mxu0
    %937 = vdwg.mxu0
    %v938 = vmax.f32 %v933, 0.0
    %v939 = vpack.c.bf16 %v938, %v938
    %v940 = vld [vmem:[%s5] sm:$0xf]
    %v941 = vld [vmem:[%s5 + $0x4] sm:$0xf]
    %v942 = vld [vmem:[%s5 + $0x8] sm:$0xf]
    %v943 = vld [vmem:[%s5 + $0xc] sm:$0xf]
    %v944 = vld [vmem:[%s5 + $0x10] sm:$0xf]
    %v945 = vld [vmem:[%s5 + $0x14] sm:$0xf]
    %v946 = vld [vmem:[%s5 + $0x18] sm:$0xf]
    %v947 = vld [vmem:[%s5 + $0x1c] sm:$0xf]
    %v948 = vld [vmem:[%s5 + $0x20] sm:$0xf]
    %v949 = vld [vmem:[%s5 + $0x24] sm:$0xf]
    %v950 = vld [vmem:[%s5 + $0x28] sm:$0xf]
    %v951 = vld [vmem:[%s5 + $0x2c] sm:$0xf]
    %v952 = vld [vmem:[%s5 + $0x30] sm:$0xf]
    %v953 = vld [vmem:[%s5 + $0x34] sm:$0xf]
    %v954 = vld [vmem:[%s5 + $0x38] sm:$0xf]
    %v955 = vld [vmem:[%s5 + $0x3c] sm:$0xf]
    %v956 = vld [vmem:[%s6] sm:$0x1]
    %v958 = vlaneseq
    %v959 = vshrl.u32 %v958, 7
    %v960 = vsub.s32 0, %v959
    %v961 = vrot.slane %v956, %v960
    %v979 = vunpack.c.l.b16 %v940
    %v980 = vunpack.c.l.b16 %v941
    %v981 = vunpack.c.l.b16 %v942
    %v982 = vunpack.c.l.b16 %v943
    %v983 = vunpack.c.l.b16 %v944
    %v984 = vunpack.c.l.b16 %v945
    %v985 = vunpack.c.l.b16 %v946
    %v986 = vunpack.c.l.b16 %v947
    %v987 = vunpack.c.l.b16 %v948
    %v988 = vunpack.c.l.b16 %v949
    %v989 = vunpack.c.l.b16 %v950
    %v990 = vunpack.c.l.b16 %v951
    %v991 = vunpack.c.l.b16 %v952
    %v992 = vunpack.c.l.b16 %v953
    %v993 = vunpack.c.l.b16 %v954
    %v994 = vunpack.c.l.b16 %v955
    %v995 = vpack.c.b16 %v980, %v979
    %v996 = vpack.c.b16 %v982, %v981
    %v997 = vpack.c.b16 %v984, %v983
    %v998 = vpack.c.b16 %v986, %v985
    %v999 = vpack.c.b16 %v988, %v987
    %v1000 = vpack.c.b16 %v990, %v989
    %v1001 = vpack.c.b16 %v992, %v991
    %v1002 = vpack.c.b16 %v994, %v993
    %1011 = vmatprep.subr.bf16.mxu0 0
    %1012 = vmatpush1.bf16.msra.mxu0 %v995
    %1013 = vmatprep.subr.bf16.mxu0 0
    %1014 = vmatpush1.bf16.msra.mxu0 %v996
    %1015 = vmatprep.subr.bf16.mxu0 0
    %1016 = vmatpush1.bf16.msra.mxu0 %v997
    %1017 = vmatprep.subr.bf16.mxu0 0
    %1018 = vmatpush1.bf16.msra.mxu0 %v998
    %1019 = vmatprep.subr.bf16.mxu0 0
    %1020 = vmatpush1.bf16.msra.mxu0 %v999
    %1021 = vmatprep.subr.bf16.mxu0 0
    %1022 = vmatpush1.bf16.msra.mxu0 %v1000
    %1023 = vmatprep.subr.bf16.mxu0 0
    %1024 = vmatpush1.bf16.msra.mxu0 %v1001
    %1025 = vmatprep.subr.bf16.mxu0 0
    %1026 = vmatpush1.bf16.msra.mxu0 %v1002
    %1027 = vmatprep.subr.bf16.mxu0 0
    %1028 = vmatpush1.bf16.msra.mxu0 0
    %1029 = vmatprep.subr.bf16.mxu0 0
    %1030 = vmatpush1.bf16.msra.mxu0 0
    %1031 = vmatprep.subr.bf16.mxu0 0
    %1032 = vmatpush1.bf16.msra.mxu0 0
    %1033 = vmatprep.subr.bf16.mxu0 0
    %1034 = vmatpush1.bf16.msra.mxu0 0
    %1035 = vmatprep.subr.bf16.mxu0 0
    %1036 = vmatpush1.bf16.msra.mxu0 0
    %1037 = vmatprep.subr.bf16.mxu0 0
    %1038 = vmatpush1.bf16.msra.mxu0 0
    %1039 = vmatprep.subr.bf16.mxu0 0
    %1040 = vmatpush1.bf16.msra.mxu0 0
    %1041 = vmatprep.subr.bf16.mxu0 0
    %1042 = vmatpush1.bf16.msra.mxu0 0
    %1043 = vmatprep.mubr.bf16.mxu0 0
    %1044 = vmatmul.mubr.bf16.gmra.mrb[0].mxu0 %v939
    %v1045 = vpop.f32.mrb[0].mxu0
    %v1046 = vadd.f32 %v961, %v1045
    %v1047 = vpop.f32.mrb[0].mxu0
    %v1048 = vpop.f32.mrb[0].mxu0
    %v1049 = vpop.f32.mrb[0].mxu0
    %1050 = vdwg.mxu0
    %1051 = vst [vmem:[#allocation5] sm:$0xff] %v1046
    // Predicated region
    $region34: #{_fused_forward.1} parent=1 // pred_check
      _
    $region35: #{_fused_forward.1} parent=1 // pred_check_branch
      %1053 = sbr.rel (0) target = $region37
    $region36: #{_fused_forward.1} parent=1 // pred_region
      %s1055 = ssub.s32 128, 32
      %1056 = vsyncadd [#allocation4], %s1055
      %s1057 = sshll.u32 [#allocation5], 4
      %s1058 = int_to_ptr.vmem [resolvable:$true] %s1057
      %1063 = dma.vmem_to_hbm [thread:$0]  %s1058, 32, %s7, [#allocation4], 32, 32, 2
    $region37: #{_fused_forward.1} parent=1 // pred_fallthru
      _
    // Predicated region
    $region38: #{_fused_forward.1} parent=1 // pred_check
      _
    $region39: #{_fused_forward.1} parent=1 // pred_check_branch
      %1065 = sbr.rel (0) target = $region41
    $region40: #{_fused_forward.1} parent=1 // pred_region
      %1066 = dma.done [#allocation4], 128
    $region41: #{_fused_forward.1} parent=1 // pred_fallthru
      _
    %1067 = vsyncpa [#allocation3], 1
    %1068 = vsyncpa [#allocation4], 1

</llo_original>
